<compile_context>
chip_gen: v6e
topology: v6e:2x2x1
jax: 0.10.0
libtpu: 0.0.40
codegen_flags: <defaults>
</compile_context>

<pallas_src>
import functools

import jax
import jax.numpy as jnp
from jax.experimental import pallas as pl
from jax.experimental.pallas import tpu as pltpu


def _udv_relu_1_kernel(x_ref, w1_ref, d_ref, w2_ref, o_ref, *, single_output):
    # fc1: plain (tb, In) @ (In, H) on the MXU -- w1 was transposed once at
    # parameter setup, so no in-kernel transpose (vxpose) on either operand.
    h = jnp.dot(x_ref[...], w1_ref[...], preferred_element_type=jnp.float32)
    # diag1 (per-feature diagonal scale) + ReLU; f32 epilogue on the VPU
    # (kept f32 on all generations: v5e has no bf16 VALU/EUP).
    h = jnp.maximum(h * d_ref[...], 0.0)

    if single_output:
        # fc2 with one output column: w2 stays in its native lane-dense (1, H)
        # row layout -> VPU multiply + lane reduce instead of a degenerate
        # (H, 1) MXU matmul; result stored lane-dense as (1, tb).
        y = jnp.sum(h * w2_ref[...], axis=-1)            # (tb,)
        o_ref[...] = y[None, :].astype(o_ref.dtype)      # (1, tb)
    else:
        # fc2 as a plain (tb, H) @ (H, Out) matmul (w2 pre-transposed once).
        y = jnp.dot(h, w2_ref[...], preferred_element_type=jnp.float32)
        o_ref[...] = y.astype(o_ref.dtype)


def prepare_udv_relu_1_params(w1, d1, w2, *, use_bf16_matmul=False):
    """One-time parameter setup (NOT per forward call).

    w1 : (num_hidden_1, num_input)   fc1 weight, native PyTorch (out, in)
    d1 : (num_hidden_1,)             D_singleConnection diagonal weight
    w2 : (num_output, num_hidden_1)  fc2 weight, native PyTorch (out, in)

    - fc1 weight is transposed once to (num_input, num_hidden) so the kernel
      issues a plain (B, K) @ (K, N) with no in-kernel transpose, and is
      optionally cast to bf16 so its HBM copy / DMA is half-size.
    - diag weight becomes a lane-dense (1, num_hidden) f32 row.
    - fc2 weight stays as a (1, num_hidden) row when num_output == 1 (VPU
      reduce path) or is transposed once to (num_hidden, num_output) otherwise.
    """
    num_hidden, num_input = w1.shape
    num_output = w2.shape[0]
    assert d1.shape == (num_hidden,)
    assert w2.shape == (num_output, num_hidden)

    w1_t = jnp.asarray(w1).T                                     # (In, H)
    if use_bf16_matmul:
        w1_t = w1_t.astype(jnp.bfloat16)
    d_row = jnp.asarray(d1, dtype=jnp.float32).reshape(1, num_hidden)
    w2_p = jnp.asarray(w2, dtype=jnp.float32)
    if num_output != 1:
        w2_p = w2_p.T                                            # (H, Out)

    return dict(w1_t=w1_t, d_row=d_row, w2=w2_p,
                num_input=num_input, num_hidden=num_hidden,
                num_output=num_output)


def udv_relu_1_forward(x, params, *, block_b=256):
    """Pallas implementation of UDV_relu_1.forward.

    x      : (B, C, H, W) or (B, num_input)  -- flattened like nn.Flatten
    params : output of prepare_udv_relu_1_params
    returns: fc2(relu(d1 * fc1(flatten(x)))).squeeze(1)
    """
    w1_t, d_row, w2_p = params["w1_t"], params["d_row"], params["w2"]
    num_input = params["num_input"]
    num_hidden = params["num_hidden"]
    num_output = params["num_output"]

    B = x.shape[0]
    x2d = x.reshape(B, -1)                        # nn.Flatten
    assert x2d.shape[1] == num_input
    out_dtype = x2d.dtype
    x_mm = x2d.astype(w1_t.dtype)                 # bf16 MXU inputs if enabled

    single_output = (num_output == 1)
    kernel = functools.partial(_udv_relu_1_kernel, single_output=single_output)

    cost = pl.CostEstimate(
        flops=2 * B * num_input * num_hidden + 2 * B * num_hidden * num_output,
        transcendentals=0,
        bytes_accessed=int(x_mm.size * x_mm.dtype.itemsize
                           + w1_t.size * w1_t.dtype.itemsize
                           + d_row.size * 4 + w2_p.size * 4
                           + B * num_output * 4),
    )

    if B <= block_b:
        # Small batch: no grid at all (kernel is launch-overhead bound; a
        # degenerate 1-step grid only adds per-step scaffolding). Full arrays
        # are resident in VMEM for the single invocation (~140 KB).
        vmem = pl.BlockSpec(memory_space=pltpu.MemorySpace.VMEM)
        if single_output:
            out_shape = jax.ShapeDtypeStruct((1, B), out_dtype)   # lane-dense
        else:
            out_shape = jax.ShapeDtypeStruct((B, num_output), out_dtype)
        out = pl.pallas_call(
            kernel,
            out_shape=out_shape,
            in_specs=[vmem, vmem, vmem, vmem],
            out_specs=vmem,
            cost_estimate=cost,
        )(x_mm, w1_t, d_row, w2_p)
    else:
        # Batched path: grid over B in tiles of block_b rows (block_b is a
        # multiple of 8 for f32 / 16 for bf16). Weights use constant
        # index_maps -> fetched once, VMEM-resident across all grid steps.
        # Batch axis marked "parallel" so v7x's two TensorCores split it.
        nb = pl.cdiv(B, block_b)
        b_pad = nb * block_b
        if b_pad != B:
            x_mm = jnp.pad(x_mm, ((0, b_pad - B), (0, 0)))
        if single_output:
            out_shape = jax.ShapeDtypeStruct((1, b_pad), out_dtype)
            out_spec = pl.BlockSpec((1, block_b), lambda i: (0, i))
        else:
            out_shape = jax.ShapeDtypeStruct((b_pad, num_output), out_dtype)
            out_spec = pl.BlockSpec((block_b, num_output), lambda i: (i, 0))
        out = pl.pallas_call(
            kernel,
            out_shape=out_shape,
            grid=(nb,),
            in_specs=[
                pl.BlockSpec((block_b, num_input), lambda i: (i, 0)),      # x
                pl.BlockSpec((num_input, num_hidden), lambda i: (0, 0)),   # fc1.T
                pl.BlockSpec((1, num_hidden), lambda i: (0, 0)),           # diag1
                pl.BlockSpec(w2_p.shape, lambda i: (0, 0)),                # fc2
            ],
            out_specs=out_spec,
            compiler_params=pltpu.CompilerParams(
                dimension_semantics=("parallel",)),
            cost_estimate=cost,
        )(x_mm, w1_t, d_row, w2_p)

    if single_output:
        return out[0, :B]          # (B,)  == torch .squeeze(1)
    return out[:B]                 # squeeze(1) is a no-op when num_output != 1


if __name__ == "__main__":
    # Small, module-consistent shapes: x = (2, 4, 16, 16) -> num_input = 1024
    B, C, H, W = 2, 4, 16, 16
    num_input = C * H * W          # 1024
    num_hidden_1 = 32
    num_output = 1                 # makes .squeeze(1) meaningful

    key = jax.random.PRNGKey(0)
    kx, k1, kd, k2 = jax.random.split(key, 4)

    x = jax.random.normal(kx, (B, C, H, W), dtype=jnp.float32)

    # Deterministic parameter init (PyTorch Linear-style uniform bounds).
    bound1 = 1.0 / (num_input ** 0.5)
    bound2 = 1.0 / (num_hidden_1 ** 0.5)
    w1 = jax.random.uniform(k1, (num_hidden_1, num_input),
                            minval=-bound1, maxval=bound1, dtype=jnp.float32)
    # D_singleConnection weight: per-feature diagonal scale (include negatives
    # so the diag-before-ReLU ordering is actually exercised).
    d1 = jax.random.uniform(kd, (num_hidden_1,),
                            minval=-1.0, maxval=1.0, dtype=jnp.float32)
    w2 = jax.random.uniform(k2, (num_output, num_hidden_1),
                            minval=-bound2, maxval=bound2, dtype=jnp.float32)

    # Plain-JAX reference of the PyTorch forward.
    def ref_fwd(xx, ww1, dd1, ww2):
        x2d = xx.reshape(xx.shape[0], -1)
        h_ref = jnp.maximum((x2d @ ww1.T) * dd1[None, :], 0.0)
        y_ref = h_ref @ ww2.T
        return y_ref[:, 0] if ww2.shape[0] == 1 else y_ref

    # 1) f32 path, no grid (B=2): exact module semantics.
    params = prepare_udv_relu_1_params(w1, d1, w2)
    y = udv_relu_1_forward(x, params)
    jax.block_until_ready(y)
    y_ref = ref_fwd(x, w1, d1, w2)
    assert y.shape == (B,)
    assert jnp.allclose(y, y_ref, atol=1e-5, rtol=1e-5)

    # 2) bf16 MXU-input path (halves the dominant fc1-weight DMA), f32 epilogue.
    params_bf16 = prepare_udv_relu_1_params(w1, d1, w2, use_bf16_matmul=True)
    y_bf16 = udv_relu_1_forward(x, params_bf16)
    jax.block_until_ready(y_bf16)
    assert jnp.allclose(y_bf16, y_ref, atol=5e-2, rtol=5e-2)

    # 3) Batched / tiled path: grid over B, weights VMEM-resident across steps,
    #    batch axis "parallel" (both v7x TensorCores used).
    Bb = 512
    xb = jax.random.normal(jax.random.PRNGKey(1), (Bb, C, H, W),
                           dtype=jnp.float32)
    yb = udv_relu_1_forward(xb, params, block_b=256)
    jax.block_until_ready(yb)
    yb_ref = ref_fwd(xb, w1, d1, w2)
    assert yb.shape == (Bb,)
    assert jnp.allclose(yb, yb_ref, atol=1e-4, rtol=1e-4)

    print("KERNEL_OK")
</pallas_src>

<mosaic_0001>
module attributes {stable_mosaic.version = 11 : i64} {
  func.func @_udv_relu_1_kernel(%arg0: memref<2x1024xf32, #tpu.memory_space<vmem>>, %arg1: memref<1024x32xf32, #tpu.memory_space<vmem>>, %arg2: memref<1x32xf32, #tpu.memory_space<vmem>>, %arg3: memref<1x32xf32, #tpu.memory_space<vmem>>, %arg4: memref<1x2xf32, #tpu.memory_space<vmem>>) attributes {dimension_semantics = [], scalar_prefetch = 0 : i64, scratch_operands = 0 : i64, tpu.core_type = #tpu.core_type<tc>} {
    %c0 = arith.constant 0 : index
    %c0_0 = arith.constant 0 : index
    %0 = vector.load %arg0[%c0, %c0_0] : memref<2x1024xf32, #tpu.memory_space<vmem>>, vector<2x1024xf32>
    %c0_1 = arith.constant 0 : index
    %c0_2 = arith.constant 0 : index
    %1 = vector.load %arg1[%c0_1, %c0_2] : memref<1024x32xf32, #tpu.memory_space<vmem>>, vector<1024x32xf32>
    %cst = arith.constant dense<0.000000e+00> : vector<2x32xf32>
    %2 = tpu.matmul %0, %1, %cst {dimension_numbers = #tpu.dot_dimension_numbers<[1], [0], [0], [1], [0, 0, 1, 1], [], []>} : vector<2x1024xf32>, vector<1024x32xf32>, vector<2x32xf32> -> vector<2x32xf32>
    %c0_3 = arith.constant 0 : index
    %c0_4 = arith.constant 0 : index
    %3 = vector.load %arg2[%c0_3, %c0_4] : memref<1x32xf32, #tpu.memory_space<vmem>>, vector<1x32xf32>
    %4 = vector.broadcast %3 : vector<1x32xf32> to vector<2x32xf32>
    %5 = arith.mulf %2, %4 : vector<2x32xf32>
    %cst_5 = arith.constant 0.000000e+00 : f32
    %6 = vector.broadcast %cst_5 : f32 to vector<2x32xf32>
    %7 = arith.maximumf %5, %6 : vector<2x32xf32>
    %c0_6 = arith.constant 0 : index
    %c0_7 = arith.constant 0 : index
    %8 = vector.load %arg3[%c0_6, %c0_7] : memref<1x32xf32, #tpu.memory_space<vmem>>, vector<1x32xf32>
    %9 = vector.broadcast %8 : vector<1x32xf32> to vector<2x32xf32>
    %10 = arith.mulf %7, %9 : vector<2x32xf32>
    %cst_8 = arith.constant dense<0.000000e+00> : vector<2xf32>
    %11 = vector.multi_reduction <add>, %10, %cst_8 [1] : vector<2x32xf32> to vector<2xf32>
    %12 = vector.shape_cast %11 : vector<2xf32> to vector<1x2xf32>
    %c0_9 = arith.constant 0 : index
    %c0_10 = arith.constant 0 : index
    %13 = vector.load %arg4[%c0_9, %c0_10] : memref<1x2xf32, #tpu.memory_space<vmem>>, vector<1x2xf32>
    tpu.vector_store %arg4[%c0_9, %c0_10], %12 {strides = array<i32>} : memref<1x2xf32, #tpu.memory_space<vmem>>, vector<1x2xf32>,
    return
  }
}

</mosaic_0001>

<llo_original>
// kernel: tpu_custom_call.1
$region0: #{tpu_custom_call.1}
  #allocation0 [shape = 'u32[]', space=smem, size = 0x4, offset = 0x4, fixed_abs, tag = 'smem constant byte address 0x4 - core index']
  #allocation1 [shape = 'u32[144,128]{1,0:T(1,128)}', space=vmem, size = 0x12000, scoped, tag = 'internal scratch']
  %s0 = inlined_call_operand.vmem [shape: f32[2,1024], index: 0, kind: input, shape index: {}]
  %s1 = inlined_call_operand.vmem [shape: f32[1024,32], index: 1, kind: input, shape index: {}]
  %s2 = inlined_call_operand.vmem [shape: f32[1,32], index: 2, kind: input, shape index: {}]
  %s3 = inlined_call_operand.vmem [shape: f32[1,32], index: 3, kind: input, shape index: {}]
  %s4 = inlined_call_operand.hbm [shape: f32[1,2], index: 4, kind: output, shape index: {}]
  %s5 = sld [smem:[#allocation0]]
  $region26: #{tpu_custom_call.1} parent=0
    _
  %s7 = ssub.s32 1, %s5
  %s8 = scalar_select 0, %s7, %s5
  $region1: #{tpu_custom_call.1} parent=0
    #allocation2 [shape = 'u8[512]{0}', space=vmem, size = 0x400, scoped, tag = 'output window, operand 0, single buffered']
    #allocation3 [shape = 's32[1]{0}', space=sflag, size = 0x4, scoped, tag = 'scoped memory for tpu_custom_call.1']
    %9 = vsyncpa [#allocation3], 0
    // Predicated region
    $region2: #{tpu_custom_call.1} parent=1 // pred_check
      _
    $region3: #{tpu_custom_call.1} parent=1 // pred_check_branch
      %11 = sbr.rel (0) target = $region5
    $region4: #{tpu_custom_call.1} parent=1 // pred_region
      _
    $region5: #{tpu_custom_call.1} parent=1 // pred_fallthru
      _
    // Predicated region
    $region6: #{tpu_custom_call.1} parent=1 // pred_check
      _
    $region7: #{tpu_custom_call.1} parent=1 // pred_check_branch
      %13 = sbr.rel (0) target = $region9
    $region8: #{tpu_custom_call.1} parent=1 // pred_region
      _
    $region9: #{tpu_custom_call.1} parent=1 // pred_fallthru
      _
    // Predicated region
    $region10: #{tpu_custom_call.1} parent=1 // pred_check
      _
    $region11: #{tpu_custom_call.1} parent=1 // pred_check_branch
      %15 = sbr.rel (0) target = $region13
    $region12: #{tpu_custom_call.1} parent=1 // pred_region
      _
    $region13: #{tpu_custom_call.1} parent=1 // pred_fallthru
      _
    // Predicated region
    $region14: #{tpu_custom_call.1} parent=1 // pred_check
      _
    $region15: #{tpu_custom_call.1} parent=1 // pred_check_branch
      %17 = sbr.rel (0) target = $region17
    $region16: #{tpu_custom_call.1} parent=1 // pred_region
      _
    $region17: #{tpu_custom_call.1} parent=1 // pred_fallthru
      _
    %v18 = vld [vmem:[%s0] sm:$0xff]
    %v19 = vld [vmem:[%s0 + $0x8] sm:$0xff]
    %v20 = vld [vmem:[%s1] sm:$0xff]
    %v21 = vld [vmem:[%s1 + $0x8] sm:$0xff]
    %v22 = vld [vmem:[%s1 + $0x10] sm:$0xff]
    %v23 = vld [vmem:[%s1 + $0x18] sm:$0xff]
    %v24 = vld [vmem:[%s1 + $0x20] sm:$0xff]
    %v25 = vld [vmem:[%s1 + $0x28] sm:$0xff]
    %v26 = vld [vmem:[%s1 + $0x30] sm:$0xff]
    %v27 = vld [vmem:[%s1 + $0x38] sm:$0xff]
    %v28 = vld [vmem:[%s1 + $0x40] sm:$0xff]
    %v29 = vld [vmem:[%s1 + $0x48] sm:$0xff]
    %v30 = vld [vmem:[%s1 + $0x50] sm:$0xff]
    %v31 = vld [vmem:[%s1 + $0x58] sm:$0xff]
    %v32 = vld [vmem:[%s1 + $0x60] sm:$0xff]
    %v33 = vld [vmem:[%s1 + $0x68] sm:$0xff]
    %v34 = vld [vmem:[%s1 + $0x70] sm:$0xff]
    %v35 = vld [vmem:[%s1 + $0x78] sm:$0xff]
    %v36 = vld [vmem:[%s1 + $0x80] sm:$0xff]
    %v37 = vld [vmem:[%s1 + $0x88] sm:$0xff]
    %v38 = vld [vmem:[%s1 + $0x90] sm:$0xff]
    %v39 = vld [vmem:[%s1 + $0x98] sm:$0xff]
    %v40 = vld [vmem:[%s1 + $0xa0] sm:$0xff]
    %v41 = vld [vmem:[%s1 + $0xa8] sm:$0xff]
    %v42 = vld [vmem:[%s1 + $0xb0] sm:$0xff]
    %v43 = vld [vmem:[%s1 + $0xb8] sm:$0xff]
    %v44 = vld [vmem:[%s1 + $0xc0] sm:$0xff]
    %v45 = vld [vmem:[%s1 + $0xc8] sm:$0xff]
    %v46 = vld [vmem:[%s1 + $0xd0] sm:$0xff]
    %v47 = vld [vmem:[%s1 + $0xd8] sm:$0xff]
    %v48 = vld [vmem:[%s1 + $0xe0] sm:$0xff]
    %v49 = vld [vmem:[%s1 + $0xe8] sm:$0xff]
    %v50 = vld [vmem:[%s1 + $0xf0] sm:$0xff]
    %v51 = vld [vmem:[%s1 + $0xf8] sm:$0xff]
    %v52 = vld [vmem:[%s1 + $0x100] sm:$0xff]
    %v53 = vld [vmem:[%s1 + $0x108] sm:$0xff]
    %v54 = vld [vmem:[%s1 + $0x110] sm:$0xff]
    %v55 = vld [vmem:[%s1 + $0x118] sm:$0xff]
    %v56 = vld [vmem:[%s1 + $0x120] sm:$0xff]
    %v57 = vld [vmem:[%s1 + $0x128] sm:$0xff]
    %v58 = vld [vmem:[%s1 + $0x130] sm:$0xff]
    %v59 = vld [vmem:[%s1 + $0x138] sm:$0xff]
    %v60 = vld [vmem:[%s1 + $0x140] sm:$0xff]
    %v61 = vld [vmem:[%s1 + $0x148] sm:$0xff]
    %v62 = vld [vmem:[%s1 + $0x150] sm:$0xff]
    %v63 = vld [vmem:[%s1 + $0x158] sm:$0xff]
    %v64 = vld [vmem:[%s1 + $0x160] sm:$0xff]
    %v65 = vld [vmem:[%s1 + $0x168] sm:$0xff]
    %v66 = vld [vmem:[%s1 + $0x170] sm:$0xff]
    %v67 = vld [vmem:[%s1 + $0x178] sm:$0xff]
    %v68 = vld [vmem:[%s1 + $0x180] sm:$0xff]
    %v69 = vld [vmem:[%s1 + $0x188] sm:$0xff]
    %v70 = vld [vmem:[%s1 + $0x190] sm:$0xff]
    %v71 = vld [vmem:[%s1 + $0x198] sm:$0xff]
    %v72 = vld [vmem:[%s1 + $0x1a0] sm:$0xff]
    %v73 = vld [vmem:[%s1 + $0x1a8] sm:$0xff]
    %v74 = vld [vmem:[%s1 + $0x1b0] sm:$0xff]
    %v75 = vld [vmem:[%s1 + $0x1b8] sm:$0xff]
    %v76 = vld [vmem:[%s1 + $0x1c0] sm:$0xff]
    %v77 = vld [vmem:[%s1 + $0x1c8] sm:$0xff]
    %v78 = vld [vmem:[%s1 + $0x1d0] sm:$0xff]
    %v79 = vld [vmem:[%s1 + $0x1d8] sm:$0xff]
    %v80 = vld [vmem:[%s1 + $0x1e0] sm:$0xff]
    %v81 = vld [vmem:[%s1 + $0x1e8] sm:$0xff]
    %v82 = vld [vmem:[%s1 + $0x1f0] sm:$0xff]
    %v83 = vld [vmem:[%s1 + $0x1f8] sm:$0xff]
    %v84 = vld [vmem:[%s1 + $0x200] sm:$0xff]
    %v85 = vld [vmem:[%s1 + $0x208] sm:$0xff]
    %v86 = vld [vmem:[%s1 + $0x210] sm:$0xff]
    %v87 = vld [vmem:[%s1 + $0x218] sm:$0xff]
    %v88 = vld [vmem:[%s1 + $0x220] sm:$0xff]
    %v89 = vld [vmem:[%s1 + $0x228] sm:$0xff]
    %v90 = vld [vmem:[%s1 + $0x230] sm:$0xff]
    %v91 = vld [vmem:[%s1 + $0x238] sm:$0xff]
    %v92 = vld [vmem:[%s1 + $0x240] sm:$0xff]
    %v93 = vld [vmem:[%s1 + $0x248] sm:$0xff]
    %v94 = vld [vmem:[%s1 + $0x250] sm:$0xff]
    %v95 = vld [vmem:[%s1 + $0x258] sm:$0xff]
    %v96 = vld [vmem:[%s1 + $0x260] sm:$0xff]
    %v97 = vld [vmem:[%s1 + $0x268] sm:$0xff]
    %v98 = vld [vmem:[%s1 + $0x270] sm:$0xff]
    %v99 = vld [vmem:[%s1 + $0x278] sm:$0xff]
    %v100 = vld [vmem:[%s1 + $0x280] sm:$0xff]
    %v101 = vld [vmem:[%s1 + $0x288] sm:$0xff]
    %v102 = vld [vmem:[%s1 + $0x290] sm:$0xff]
    %v103 = vld [vmem:[%s1 + $0x298] sm:$0xff]
    %v104 = vld [vmem:[%s1 + $0x2a0] sm:$0xff]
    %v105 = vld [vmem:[%s1 + $0x2a8] sm:$0xff]
    %v106 = vld [vmem:[%s1 + $0x2b0] sm:$0xff]
    %v107 = vld [vmem:[%s1 + $0x2b8] sm:$0xff]
    %v108 = vld [vmem:[%s1 + $0x2c0] sm:$0xff]
    %v109 = vld [vmem:[%s1 + $0x2c8] sm:$0xff]
    %v110 = vld [vmem:[%s1 + $0x2d0] sm:$0xff]
    %v111 = vld [vmem:[%s1 + $0x2d8] sm:$0xff]
    %v112 = vld [vmem:[%s1 + $0x2e0] sm:$0xff]
    %v113 = vld [vmem:[%s1 + $0x2e8] sm:$0xff]
    %v114 = vld [vmem:[%s1 + $0x2f0] sm:$0xff]
    %v115 = vld [vmem:[%s1 + $0x2f8] sm:$0xff]
    %v116 = vld [vmem:[%s1 + $0x300] sm:$0xff]
    %v117 = vld [vmem:[%s1 + $0x308] sm:$0xff]
    %v118 = vld [vmem:[%s1 + $0x310] sm:$0xff]
    %v119 = vld [vmem:[%s1 + $0x318] sm:$0xff]
    %v120 = vld [vmem:[%s1 + $0x320] sm:$0xff]
    %v121 = vld [vmem:[%s1 + $0x328] sm:$0xff]
    %v122 = vld [vmem:[%s1 + $0x330] sm:$0xff]
    %v123 = vld [vmem:[%s1 + $0x338] sm:$0xff]
    %v124 = vld [vmem:[%s1 + $0x340] sm:$0xff]
    %v125 = vld [vmem:[%s1 + $0x348] sm:$0xff]
    %v126 = vld [vmem:[%s1 + $0x350] sm:$0xff]
    %v127 = vld [vmem:[%s1 + $0x358] sm:$0xff]
    %v128 = vld [vmem:[%s1 + $0x360] sm:$0xff]
    %v129 = vld [vmem:[%s1 + $0x368] sm:$0xff]
    %v130 = vld [vmem:[%s1 + $0x370] sm:$0xff]
    %v131 = vld [vmem:[%s1 + $0x378] sm:$0xff]
    %v132 = vld [vmem:[%s1 + $0x380] sm:$0xff]
    %v133 = vld [vmem:[%s1 + $0x388] sm:$0xff]
    %v134 = vld [vmem:[%s1 + $0x390] sm:$0xff]
    %v135 = vld [vmem:[%s1 + $0x398] sm:$0xff]
    %v136 = vld [vmem:[%s1 + $0x3a0] sm:$0xff]
    %v137 = vld [vmem:[%s1 + $0x3a8] sm:$0xff]
    %v138 = vld [vmem:[%s1 + $0x3b0] sm:$0xff]
    %v139 = vld [vmem:[%s1 + $0x3b8] sm:$0xff]
    %v140 = vld [vmem:[%s1 + $0x3c0] sm:$0xff]
    %v141 = vld [vmem:[%s1 + $0x3c8] sm:$0xff]
    %v142 = vld [vmem:[%s1 + $0x3d0] sm:$0xff]
    %v143 = vld [vmem:[%s1 + $0x3d8] sm:$0xff]
    %v144 = vld [vmem:[%s1 + $0x3e0] sm:$0xff]
    %v145 = vld [vmem:[%s1 + $0x3e8] sm:$0xff]
    %v146 = vld [vmem:[%s1 + $0x3f0] sm:$0xff]
    %v147 = vld [vmem:[%s1 + $0x3f8] sm:$0xff]
    %v150 = vcombine.high %v18, %v18
    %v152 = vunpack.c.l.s4 1983009808
    %v153 = vunpack.c.0.s8 %v152
    %v154 = vlaneseq
    %v155 = vshrl.u32 %v154, 7
    %v156 = vsub.s32 %v153, %v155
    %v157 = vrot.slane %v18, %v156
    %v159 = vunpack.c.l.s4 1983009808
    %v160 = vunpack.c.0.s8 %v159
    %v161 = vlaneseq
    %v162 = vshrl.u32 %v161, 7
    %v163 = vsub.s32 %v160, %v162
    %v164 = vrot.slane %v150, %v163
    %v165 = vcombine.high %v157, %v157
    %v166 = vcombine.high %v164, %v164
    %v167 = vcombine.high %v19, %v19
    %v169 = vunpack.c.l.s4 1983009808
    %v170 = vunpack.c.0.s8 %v169
    %v171 = vlaneseq
    %v172 = vshrl.u32 %v171, 7
    %v173 = vsub.s32 %v170, %v172
    %v174 = vrot.slane %v19, %v173
    %v176 = vunpack.c.l.s4 1983009808
    %v177 = vunpack.c.0.s8 %v176
    %v178 = vlaneseq
    %v179 = vshrl.u32 %v178, 7
    %v180 = vsub.s32 %v177, %v179
    %v181 = vrot.slane %v167, %v180
    %v182 = vcombine.high %v174, %v174
    %v183 = vcombine.high %v181, %v181
    %192 = vmatprep.subr.mxu0 0.0
    %193 = vmatpush1.msra.mxu0 %v35
    %194 = vmatprep.subr.mxu0 0.0
    %195 = vmatpush1.msra.mxu0 %v34
    %196 = vmatprep.subr.mxu0 0.0
    %197 = vmatpush1.msra.mxu0 %v33
    %198 = vmatprep.subr.mxu0 0.0
    %199 = vmatpush1.msra.mxu0 %v32
    %200 = vmatprep.subr.mxu0 0.0
    %201 = vmatpush1.msra.mxu0 %v31
    %202 = vmatprep.subr.mxu0 0.0
    %203 = vmatpush1.msra.mxu0 %v30
    %204 = vmatprep.subr.mxu0 0.0
    %205 = vmatpush1.msra.mxu0 %v29
    %206 = vmatprep.subr.mxu0 0.0
    %207 = vmatpush1.msra.mxu0 %v28
    %208 = vmatprep.subr.mxu0 0.0
    %209 = vmatpush1.msra.mxu0 %v27
    %210 = vmatprep.subr.mxu0 0.0
    %211 = vmatpush1.msra.mxu0 %v26
    %212 = vmatprep.subr.mxu0 0.0
    %213 = vmatpush1.msra.mxu0 %v25
    %214 = vmatprep.subr.mxu0 0.0
    %215 = vmatpush1.msra.mxu0 %v24
    %216 = vmatprep.subr.mxu0 0.0
    %217 = vmatpush1.msra.mxu0 %v23
    %218 = vmatprep.subr.mxu0 0.0
    %219 = vmatpush1.msra.mxu0 %v22
    %220 = vmatprep.subr.mxu0 0.0
    %221 = vmatpush1.msra.mxu0 %v21
    %222 = vmatprep.subr.mxu0 0.0
    %223 = vmatpush1.msra.mxu0 %v20
    %224 = vmatprep.subr.mxu0 0.0
    %225 = vmatpush2.msra.mxu0 %v51
    %226 = vmatprep.subr.mxu0 0.0
    %227 = vmatpush2.msra.mxu0 %v50
    %228 = vmatprep.subr.mxu0 0.0
    %229 = vmatpush2.msra.mxu0 %v49
    %230 = vmatprep.subr.mxu0 0.0
    %231 = vmatpush2.msra.mxu0 %v48
    %232 = vmatprep.subr.mxu0 0.0
    %233 = vmatpush2.msra.mxu0 %v47
    %234 = vmatprep.subr.mxu0 0.0
    %235 = vmatpush2.msra.mxu0 %v46
    %236 = vmatprep.subr.mxu0 0.0
    %237 = vmatpush2.msra.mxu0 %v45
    %238 = vmatprep.subr.mxu0 0.0
    %239 = vmatpush2.msra.mxu0 %v44
    %240 = vmatprep.subr.mxu0 0.0
    %241 = vmatpush2.msra.mxu0 %v43
    %242 = vmatprep.subr.mxu0 0.0
    %243 = vmatpush2.msra.mxu0 %v42
    %244 = vmatprep.subr.mxu0 0.0
    %245 = vmatpush2.msra.mxu0 %v41
    %246 = vmatprep.subr.mxu0 0.0
    %247 = vmatpush2.msra.mxu0 %v40
    %248 = vmatprep.subr.mxu0 0.0
    %249 = vmatpush2.msra.mxu0 %v39
    %250 = vmatprep.subr.mxu0 0.0
    %251 = vmatpush2.msra.mxu0 %v38
    %252 = vmatprep.subr.mxu0 0.0
    %253 = vmatpush2.msra.mxu0 %v37
    %254 = vmatprep.subr.mxu0 0.0
    %255 = vmatpush2.msra.mxu0 %v36
    %256 = vmatprep.mubr.f32.mxu0 %v165
    %257 = vmatmul.mubr.f32.gmra.mxu0 %v157
    %v258 = vpop.f32.mrf.mxu0
    %v259 = vadd.f32 0.0, %v258
    %v260 = vpop.f32.mrf.mxu0
    %261 = vdwg.mxu0
    %262 = vmatprep.subr.mxu0 0.0
    %263 = vmatpush1.msra.mxu0 %v67
    %264 = vmatprep.subr.mxu0 0.0
    %265 = vmatpush1.msra.mxu0 %v66
    %266 = vmatprep.subr.mxu0 0.0
    %267 = vmatpush1.msra.mxu0 %v65
    %268 = vmatprep.subr.mxu0 0.0
    %269 = vmatpush1.msra.mxu0 %v64
    %270 = vmatprep.subr.mxu0 0.0
    %271 = vmatpush1.msra.mxu0 %v63
    %272 = vmatprep.subr.mxu0 0.0
    %273 = vmatpush1.msra.mxu0 %v62
    %274 = vmatprep.subr.mxu0 0.0
    %275 = vmatpush1.msra.mxu0 %v61
    %276 = vmatprep.subr.mxu0 0.0
    %277 = vmatpush1.msra.mxu0 %v60
    %278 = vmatprep.subr.mxu0 0.0
    %279 = vmatpush1.msra.mxu0 %v59
    %280 = vmatprep.subr.mxu0 0.0
    %281 = vmatpush1.msra.mxu0 %v58
    %282 = vmatprep.subr.mxu0 0.0
    %283 = vmatpush1.msra.mxu0 %v57
    %284 = vmatprep.subr.mxu0 0.0
    %285 = vmatpush1.msra.mxu0 %v56
    %286 = vmatprep.subr.mxu0 0.0
    %287 = vmatpush1.msra.mxu0 %v55
    %288 = vmatprep.subr.mxu0 0.0
    %289 = vmatpush1.msra.mxu0 %v54
    %290 = vmatprep.subr.mxu0 0.0
    %291 = vmatpush1.msra.mxu0 %v53
    %292 = vmatprep.subr.mxu0 0.0
    %293 = vmatpush1.msra.mxu0 %v52
    %294 = vmatprep.subr.mxu0 0.0
    %295 = vmatpush2.msra.mxu0 %v83
    %296 = vmatprep.subr.mxu0 0.0
    %297 = vmatpush2.msra.mxu0 %v82
    %298 = vmatprep.subr.mxu0 0.0
    %299 = vmatpush2.msra.mxu0 %v81
    %300 = vmatprep.subr.mxu0 0.0
    %301 = vmatpush2.msra.mxu0 %v80
    %302 = vmatprep.subr.mxu0 0.0
    %303 = vmatpush2.msra.mxu0 %v79
    %304 = vmatprep.subr.mxu0 0.0
    %305 = vmatpush2.msra.mxu0 %v78
    %306 = vmatprep.subr.mxu0 0.0
    %307 = vmatpush2.msra.mxu0 %v77
    %308 = vmatprep.subr.mxu0 0.0
    %309 = vmatpush2.msra.mxu0 %v76
    %310 = vmatprep.subr.mxu0 0.0
    %311 = vmatpush2.msra.mxu0 %v75
    %312 = vmatprep.subr.mxu0 0.0
    %313 = vmatpush2.msra.mxu0 %v74
    %314 = vmatprep.subr.mxu0 0.0
    %315 = vmatpush2.msra.mxu0 %v73
    %316 = vmatprep.subr.mxu0 0.0
    %317 = vmatpush2.msra.mxu0 %v72
    %318 = vmatprep.subr.mxu0 0.0
    %319 = vmatpush2.msra.mxu0 %v71
    %320 = vmatprep.subr.mxu0 0.0
    %321 = vmatpush2.msra.mxu0 %v70
    %322 = vmatprep.subr.mxu0 0.0
    %323 = vmatpush2.msra.mxu0 %v69
    %324 = vmatprep.subr.mxu0 0.0
    %325 = vmatpush2.msra.mxu0 %v68
    %326 = vmatprep.mubr.f32.mxu0 %v166
    %327 = vmatmul.mubr.f32.gmra.mxu0 %v164
    %v328 = vpop.f32.mrf.mxu0
    %v329 = vadd.f32 %v259, %v328
    %v330 = vpop.f32.mrf.mxu0
    %331 = vdwg.mxu0
    %332 = vmatprep.subr.mxu0 0.0
    %333 = vmatpush1.msra.mxu0 %v99
    %334 = vmatprep.subr.mxu0 0.0
    %335 = vmatpush1.msra.mxu0 %v98
    %336 = vmatprep.subr.mxu0 0.0
    %337 = vmatpush1.msra.mxu0 %v97
    %338 = vmatprep.subr.mxu0 0.0
    %339 = vmatpush1.msra.mxu0 %v96
    %340 = vmatprep.subr.mxu0 0.0
    %341 = vmatpush1.msra.mxu0 %v95
    %342 = vmatprep.subr.mxu0 0.0
    %343 = vmatpush1.msra.mxu0 %v94
    %344 = vmatprep.subr.mxu0 0.0
    %345 = vmatpush1.msra.mxu0 %v93
    %346 = vmatprep.subr.mxu0 0.0
    %347 = vmatpush1.msra.mxu0 %v92
    %348 = vmatprep.subr.mxu0 0.0
    %349 = vmatpush1.msra.mxu0 %v91
    %350 = vmatprep.subr.mxu0 0.0
    %351 = vmatpush1.msra.mxu0 %v90
    %352 = vmatprep.subr.mxu0 0.0
    %353 = vmatpush1.msra.mxu0 %v89
    %354 = vmatprep.subr.mxu0 0.0
    %355 = vmatpush1.msra.mxu0 %v88
    %356 = vmatprep.subr.mxu0 0.0
    %357 = vmatpush1.msra.mxu0 %v87
    %358 = vmatprep.subr.mxu0 0.0
    %359 = vmatpush1.msra.mxu0 %v86
    %360 = vmatprep.subr.mxu0 0.0
    %361 = vmatpush1.msra.mxu0 %v85
    %362 = vmatprep.subr.mxu0 0.0
    %363 = vmatpush1.msra.mxu0 %v84
    %364 = vmatprep.subr.mxu0 0.0
    %365 = vmatpush2.msra.mxu0 %v115
    %366 = vmatprep.subr.mxu0 0.0
    %367 = vmatpush2.msra.mxu0 %v114
    %368 = vmatprep.subr.mxu0 0.0
    %369 = vmatpush2.msra.mxu0 %v113
    %370 = vmatprep.subr.mxu0 0.0
    %371 = vmatpush2.msra.mxu0 %v112
    %372 = vmatprep.subr.mxu0 0.0
    %373 = vmatpush2.msra.mxu0 %v111
    %374 = vmatprep.subr.mxu0 0.0
    %375 = vmatpush2.msra.mxu0 %v110
    %376 = vmatprep.subr.mxu0 0.0
    %377 = vmatpush2.msra.mxu0 %v109
    %378 = vmatprep.subr.mxu0 0.0
    %379 = vmatpush2.msra.mxu0 %v108
    %380 = vmatprep.subr.mxu0 0.0
    %381 = vmatpush2.msra.mxu0 %v107
    %382 = vmatprep.subr.mxu0 0.0
    %383 = vmatpush2.msra.mxu0 %v106
    %384 = vmatprep.subr.mxu0 0.0
    %385 = vmatpush2.msra.mxu0 %v105
    %386 = vmatprep.subr.mxu0 0.0
    %387 = vmatpush2.msra.mxu0 %v104
    %388 = vmatprep.subr.mxu0 0.0
    %389 = vmatpush2.msra.mxu0 %v103
    %390 = vmatprep.subr.mxu0 0.0
    %391 = vmatpush2.msra.mxu0 %v102
    %392 = vmatprep.subr.mxu0 0.0
    %393 = vmatpush2.msra.mxu0 %v101
    %394 = vmatprep.subr.mxu0 0.0
    %395 = vmatpush2.msra.mxu0 %v100
    %396 = vmatprep.mubr.f32.mxu0 %v182
    %397 = vmatmul.mubr.f32.gmra.mxu0 %v174
    %v398 = vpop.f32.mrf.mxu0
    %v399 = vadd.f32 %v329, %v398
    %v400 = vpop.f32.mrf.mxu0
    %401 = vdwg.mxu0
    %402 = vmatprep.subr.mxu0 0.0
    %403 = vmatpush1.msra.mxu0 %v131
    %404 = vmatprep.subr.mxu0 0.0
    %405 = vmatpush1.msra.mxu0 %v130
    %406 = vmatprep.subr.mxu0 0.0
    %407 = vmatpush1.msra.mxu0 %v129
    %408 = vmatprep.subr.mxu0 0.0
    %409 = vmatpush1.msra.mxu0 %v128
    %410 = vmatprep.subr.mxu0 0.0
    %411 = vmatpush1.msra.mxu0 %v127
    %412 = vmatprep.subr.mxu0 0.0
    %413 = vmatpush1.msra.mxu0 %v126
    %414 = vmatprep.subr.mxu0 0.0
    %415 = vmatpush1.msra.mxu0 %v125
    %416 = vmatprep.subr.mxu0 0.0
    %417 = vmatpush1.msra.mxu0 %v124
    %418 = vmatprep.subr.mxu0 0.0
    %419 = vmatpush1.msra.mxu0 %v123
    %420 = vmatprep.subr.mxu0 0.0
    %421 = vmatpush1.msra.mxu0 %v122
    %422 = vmatprep.subr.mxu0 0.0
    %423 = vmatpush1.msra.mxu0 %v121
    %424 = vmatprep.subr.mxu0 0.0
    %425 = vmatpush1.msra.mxu0 %v120
    %426 = vmatprep.subr.mxu0 0.0
    %427 = vmatpush1.msra.mxu0 %v119
    %428 = vmatprep.subr.mxu0 0.0
    %429 = vmatpush1.msra.mxu0 %v118
    %430 = vmatprep.subr.mxu0 0.0
    %431 = vmatpush1.msra.mxu0 %v117
    %432 = vmatprep.subr.mxu0 0.0
    %433 = vmatpush1.msra.mxu0 %v116
    %434 = vmatprep.subr.mxu0 0.0
    %435 = vmatpush2.msra.mxu0 %v147
    %436 = vmatprep.subr.mxu0 0.0
    %437 = vmatpush2.msra.mxu0 %v146
    %438 = vmatprep.subr.mxu0 0.0
    %439 = vmatpush2.msra.mxu0 %v145
    %440 = vmatprep.subr.mxu0 0.0
    %441 = vmatpush2.msra.mxu0 %v144
    %442 = vmatprep.subr.mxu0 0.0
    %443 = vmatpush2.msra.mxu0 %v143
    %444 = vmatprep.subr.mxu0 0.0
    %445 = vmatpush2.msra.mxu0 %v142
    %446 = vmatprep.subr.mxu0 0.0
    %447 = vmatpush2.msra.mxu0 %v141
    %448 = vmatprep.subr.mxu0 0.0
    %449 = vmatpush2.msra.mxu0 %v140
    %450 = vmatprep.subr.mxu0 0.0
    %451 = vmatpush2.msra.mxu0 %v139
    %452 = vmatprep.subr.mxu0 0.0
    %453 = vmatpush2.msra.mxu0 %v138
    %454 = vmatprep.subr.mxu0 0.0
    %455 = vmatpush2.msra.mxu0 %v137
    %456 = vmatprep.subr.mxu0 0.0
    %457 = vmatpush2.msra.mxu0 %v136
    %458 = vmatprep.subr.mxu0 0.0
    %459 = vmatpush2.msra.mxu0 %v135
    %460 = vmatprep.subr.mxu0 0.0
    %461 = vmatpush2.msra.mxu0 %v134
    %462 = vmatprep.subr.mxu0 0.0
    %463 = vmatpush2.msra.mxu0 %v133
    %464 = vmatprep.subr.mxu0 0.0
    %465 = vmatpush2.msra.mxu0 %v132
    %466 = vmatprep.mubr.f32.mxu0 %v183
    %467 = vmatmul.mubr.f32.gmra.mxu0 %v181
    %v468 = vpop.f32.mrf.mxu0
    %v469 = vadd.f32 %v399, %v468
    %v470 = vpop.f32.mrf.mxu0
    %471 = vdwg.mxu0
    %v472 = vld [vmem:[%s2] sm:$0x1]
    %v474 = vlaneseq
    %v475 = vshrl.u32 %v474, 7
    %v476 = vsub.s32 0, %v475
    %v477 = vrot.slane %v472, %v476
    %v479 = vmul.f32 %v469, %v477
    %v480 = vmax.f32 %v479, 0.0
    %v481 = vld [vmem:[%s3] sm:$0x1]
    %v483 = vlaneseq
    %v484 = vshrl.u32 %v483, 7
    %v485 = vsub.s32 0, %v484
    %v486 = vrot.slane %v481, %v485
    %v488 = vmul.f32 %v480, %v486
    %vm489 = vcmask 254976
    %v490 = vsel %vm489, %v488, 0.0
    %491 = vadd.xlane.f32.xlu0 %v490
    %v492 = vpop.xlane.xlu0 %491
    %v494 = vlaneseq
    %v495 = vand.u32 %v494, 127
    %v496 = vlaneseq
    %v497 = vshrl.u32 %v496, 7
    %v498 = vsub.s32 %v495, %v497
    %v499 = vrot.slane %v492, %v498
    %vm501 = vcmask 8192
    %502 = vst.msk [vmem:[#allocation2] sm:$0x1] %vm501, %v499
    // Predicated region
    $region18: #{tpu_custom_call.1} parent=1 // pred_check
      _
    $region19: #{tpu_custom_call.1} parent=1 // pred_check_branch
      %504 = sbr.rel (0) target = $region21
    $region20: #{tpu_custom_call.1} parent=1 // pred_region
      %s506 = ssub.s32 16, 16
      %507 = vsyncadd [#allocation3], %s506
      %s509 = sshll.u32 [#allocation2], 4
      %s510 = int_to_ptr.vmem [resolvable:$true] %s509
      %512 = dma.vmem_to_hbm [thread:$0]  %s510, 16, %s4, [#allocation3]
    $region21: #{tpu_custom_call.1} parent=1 // pred_fallthru
      _
    // Predicated region
    $region22: #{tpu_custom_call.1} parent=1 // pred_check
      _
    $region23: #{tpu_custom_call.1} parent=1 // pred_check_branch
      %514 = sbr.rel (0) target = $region25
    $region24: #{tpu_custom_call.1} parent=1 // pred_region
      %515 = dma.done [#allocation3], 16
    $region25: #{tpu_custom_call.1} parent=1 // pred_fallthru
      _
    %516 = vsyncpa [#allocation3], 1

</llo_original>
